<compile_context>
chip_gen: v7x
topology: tpu7x:2x2x1
jax: 0.10.0
libtpu: 0.0.40
codegen_flags: <defaults>
</compile_context>

<pallas_src>
import jax
import jax.numpy as jnp
from jax.experimental import pallas as pl
from jax.experimental.pallas import tpu as pltpu

LANE = 128  # TPU lane width; the batch axis is padded/tiled in multiples of this.


def _round_up(n, m):
    return pl.cdiv(n, m) * m


def dqn_kernel(x_ref, w1_ref, w2_ref, w3_ref, o_ref):
    """x_ref: (IN_ROWS, TB) bf16 (features on sublanes, batch on lanes).
    w*_ref: bias-folded (out, in) bf16 weights, VMEM-resident across the grid.
    o_ref:  (OUT_ROWS, TB) f32, lane-dense store."""
    wdt = w1_ref.dtype
    x = x_ref[...]                                                   # bf16
    h1 = jnp.dot(w1_ref[...], x, preferred_element_type=jnp.float32)
    h1 = jnp.maximum(h1, 0.0)                                        # f32 ReLU (v5e-safe)
    h2 = jnp.dot(w2_ref[...], h1.astype(wdt), preferred_element_type=jnp.float32)
    h2 = jnp.maximum(h2, 0.0)
    out = jnp.dot(w3_ref[...], h2.astype(wdt), preferred_element_type=jnp.float32)
    o_ref[...] = out.astype(o_ref.dtype)


def prepare_params(params, weight_dtype=jnp.bfloat16):
    """One-time prep (hoisted out of the per-call path).

    Weights are kept in (out, in) orientation, zero-padded to layout-friendly
    sublane counts, biases folded in via a constant-1 row that is propagated
    through the hidden activations, and cast to bf16 once."""
    w1, b1 = params["w1"], params["b1"]    # (32, state), (32,)
    w2, b2 = params["w2"], params["b2"]    # (64, 32),    (64,)
    w3, b3 = params["w3"], params["b3"]    # (act, 64),   (act,)
    h1, state_size = w1.shape
    h2 = w2.shape[0]
    action_size = w3.shape[0]

    in_rows = _round_up(state_size + 1, 8)    # features + bias row, f32/bf16-safe
    h1p = _round_up(h1 + 1, 16)               # hidden1 + bias row (bf16 packing)
    h2p = _round_up(h2 + 1, 16)               # hidden2 + bias row
    out_rows = _round_up(action_size, 8)      # output rows (f32 native sublanes)

    bias_in = state_size   # row of x slab carrying constant 1 (bias input for fc1)
    bias_h1 = h1           # row of h1 carrying constant 1 (bias input for fc2)
    bias_h2 = h2           # row of h2 carrying constant 1 (bias input for fc3)
    assert state_size < in_rows and h1 < h1p and h2 < h2p and action_size <= out_rows

    w1f, b1f = w1.astype(jnp.float32), b1.astype(jnp.float32)
    w2f, b2f = w2.astype(jnp.float32), b2.astype(jnp.float32)
    w3f, b3f = w3.astype(jnp.float32), b3.astype(jnp.float32)

    w1p = jnp.zeros((h1p, in_rows), jnp.float32)
    w1p = w1p.at[:h1, :state_size].set(w1f)
    w1p = w1p.at[:h1, bias_in].set(b1f)
    w1p = w1p.at[bias_h1, bias_in].set(1.0)          # propagate the 1 into h1

    w2p = jnp.zeros((h2p, h1p), jnp.float32)
    w2p = w2p.at[:h2, :h1].set(w2f)
    w2p = w2p.at[:h2, bias_h1].set(b2f)
    w2p = w2p.at[bias_h2, bias_h1].set(1.0)          # propagate the 1 into h2

    w3p = jnp.zeros((out_rows, h2p), jnp.float32)
    w3p = w3p.at[:action_size, :h2].set(w3f)
    w3p = w3p.at[:action_size, bias_h2].set(b3f)

    return {
        "w1p": w1p.astype(weight_dtype),
        "w2p": w2p.astype(weight_dtype),
        "w3p": w3p.astype(weight_dtype),
        "state_size": state_size,
        "action_size": action_size,
        "in_rows": in_rows,
        "out_rows": out_rows,
        "bias_in": bias_in,
    }


def dqn_forward(x, prep, *, max_tb=8192, min_steps=2):
    """x: [B, state_size] float32.  prep: cached output of prepare_params.
    Returns [B, action_size] float32 Q-values."""
    B, S = x.shape
    assert S == prep["state_size"]
    A = prep["action_size"]
    in_rows, out_rows = prep["in_rows"], prep["out_rows"]

    # Batch lives on lanes: pad only to a multiple of 128 (lane-dense), then
    # split into >=2 tiles when possible (v7x megacore) without ever padding
    # more than 128 extra columns per grid step.
    Bp = _round_up(B, LANE)
    n_steps = max(min_steps, pl.cdiv(Bp, max_tb))
    n_steps = min(n_steps, Bp // LANE)
    TB = _round_up(pl.cdiv(Bp, n_steps), LANE)
    Bp = n_steps * TB

    # Tiny bf16 input slab: real features transposed onto sublanes, a constant-1
    # bias row, zeros elsewhere (~16 B streamed per batch column).
    xt = jnp.zeros((in_rows, Bp), jnp.bfloat16)
    xt = xt.at[:S, :B].set(x.T.astype(jnp.bfloat16))
    xt = xt.at[prep["bias_in"], :B].set(jnp.bfloat16(1.0))

    w1p, w2p, w3p = prep["w1p"], prep["w2p"], prep["w3p"]

    out = pl.pallas_call(
        dqn_kernel,
        out_shape=jax.ShapeDtypeStruct((out_rows, Bp), jnp.float32),
        grid=(n_steps,),
        in_specs=[
            pl.BlockSpec((in_rows, TB), lambda i: (0, i)),
            pl.BlockSpec(w1p.shape, lambda i: (0, 0)),   # VMEM-resident across grid
            pl.BlockSpec(w2p.shape, lambda i: (0, 0)),
            pl.BlockSpec(w3p.shape, lambda i: (0, 0)),
        ],
        out_specs=pl.BlockSpec((out_rows, TB), lambda i: (0, i)),
        compiler_params=pltpu.CompilerParams(
            dimension_semantics=("parallel",)),
    )(xt, w1p, w2p, w3p)

    return out[:A, :B].T   # back to (B, action_size)


def init_dqn_params(key, state_size=4, action_size=2):
    """Deterministic init matching nn.Linear shapes (W: [out, in], b: [out])."""
    ks = jax.random.split(key, 6)

    def linear_init(kw, kb, fan_in, fan_out):
        bound = 1.0 / jnp.sqrt(fan_in)
        w = jax.random.uniform(kw, (fan_out, fan_in), jnp.float32, -bound, bound)
        b = jax.random.uniform(kb, (fan_out,), jnp.float32, -bound, bound)
        return w, b

    w1, b1 = linear_init(ks[0], ks[1], state_size, 32)
    w2, b2 = linear_init(ks[2], ks[3], 32, 64)
    w3, b3 = linear_init(ks[4], ks[5], 64, action_size)
    return {"w1": w1, "b1": b1, "w2": w2, "b2": b2, "w3": w3, "b3": b3}


def dqn_reference(x, p, weight_dtype=jnp.bfloat16):
    """f32 reference using the same bf16-rounded parameters as the kernel."""
    rd = lambda a: a.astype(weight_dtype).astype(jnp.float32)
    h1 = jnp.maximum(x @ rd(p["w1"]).T + rd(p["b1"]), 0.0)
    h2 = jnp.maximum(h1 @ rd(p["w2"]).T + rd(p["b2"]), 0.0)
    return h2 @ rd(p["w3"]).T + rd(p["b3"])


if __name__ == "__main__":
    key = jax.random.PRNGKey(0)
    k_param, k_x = jax.random.split(key)

    state_size, action_size, batch = 4, 2, 8
    params = init_dqn_params(k_param, state_size, action_size)
    x = jax.random.normal(k_x, (batch, state_size), dtype=jnp.float32)

    prep = prepare_params(params)          # one-time: transpose/pad/fold-bias/cast
    out = jax.block_until_ready(dqn_forward(x, prep))

    ref = dqn_reference(x, params)
    assert out.shape == (batch, action_size)
    # bf16 weights + bf16 activation casts (f32 accumulation) -> loosened tolerance.
    assert jnp.allclose(out, ref, atol=2e-2, rtol=2e-2), "mismatch vs reference"

    print("KERNEL_OK")
</pallas_src>

<mosaic_0001>
module attributes {stable_mosaic.version = 11 : i64} {
  func.func @dqn_kernel(%arg0: i32, %arg1: memref<8x128xbf16, #tpu.memory_space<vmem>>, %arg2: memref<48x8xbf16, #tpu.memory_space<vmem>>, %arg3: memref<80x48xbf16, #tpu.memory_space<vmem>>, %arg4: memref<8x80xbf16, #tpu.memory_space<vmem>>, %arg5: memref<8x128xf32, #tpu.memory_space<vmem>>) attributes {dimension_semantics = [#tpu.dimension_semantics<parallel>], iteration_bounds = array<i64: 1>, scalar_prefetch = 0 : i64, scratch_operands = 0 : i64, tpu.core_type = #tpu.core_type<tc>, window_params = [{transform_indices = @transform_0, window_bounds = array<i64: 8, 128>}, {pipeline_mode = #tpu.pipeline_mode<synchronous>, transform_indices = @transform_1, window_bounds = array<i64: 48, 8>}, {pipeline_mode = #tpu.pipeline_mode<synchronous>, transform_indices = @transform_2, window_bounds = array<i64: 80, 48>}, {pipeline_mode = #tpu.pipeline_mode<synchronous>, transform_indices = @transform_3, window_bounds = array<i64: 8, 80>}, {transform_indices = @transform_4, window_bounds = array<i64: 8, 128>}]} {
    %c0 = arith.constant 0 : index
    %c0_0 = arith.constant 0 : index
    %0 = vector.load %arg1[%c0, %c0_0] : memref<8x128xbf16, #tpu.memory_space<vmem>>, vector<8x128xbf16>
    %c0_1 = arith.constant 0 : index
    %c0_2 = arith.constant 0 : index
    %1 = vector.load %arg2[%c0_1, %c0_2] : memref<48x8xbf16, #tpu.memory_space<vmem>>, vector<48x8xbf16>
    %cst = arith.constant dense<0.000000e+00> : vector<48x128xf32>
    %2 = tpu.matmul %1, %0, %cst {dimension_numbers = #tpu.dot_dimension_numbers<[1], [0], [0], [1], [0, 0, 1, 1], [], []>} : vector<48x8xbf16>, vector<8x128xbf16>, vector<48x128xf32> -> vector<48x128xf32>
    %cst_3 = arith.constant 0.000000e+00 : f32
    %3 = vector.broadcast %cst_3 : f32 to vector<48x128xf32>
    %4 = arith.maximumf %2, %3 : vector<48x128xf32>
    %c0_4 = arith.constant 0 : index
    %c0_5 = arith.constant 0 : index
    %5 = vector.load %arg3[%c0_4, %c0_5] : memref<80x48xbf16, #tpu.memory_space<vmem>>, vector<80x48xbf16>
    %6 = arith.truncf %4 : vector<48x128xf32> to vector<48x128xbf16>
    %cst_6 = arith.constant dense<0.000000e+00> : vector<80x128xf32>
    %7 = tpu.matmul %5, %6, %cst_6 {dimension_numbers = #tpu.dot_dimension_numbers<[1], [0], [0], [1], [0, 0, 1, 1], [], []>} : vector<80x48xbf16>, vector<48x128xbf16>, vector<80x128xf32> -> vector<80x128xf32>
    %cst_7 = arith.constant 0.000000e+00 : f32
    %8 = vector.broadcast %cst_7 : f32 to vector<80x128xf32>
    %9 = arith.maximumf %7, %8 : vector<80x128xf32>
    %c0_8 = arith.constant 0 : index
    %c0_9 = arith.constant 0 : index
    %10 = vector.load %arg4[%c0_8, %c0_9] : memref<8x80xbf16, #tpu.memory_space<vmem>>, vector<8x80xbf16>
    %11 = arith.truncf %9 : vector<80x128xf32> to vector<80x128xbf16>
    %cst_10 = arith.constant dense<0.000000e+00> : vector<8x128xf32>
    %12 = tpu.matmul %10, %11, %cst_10 {dimension_numbers = #tpu.dot_dimension_numbers<[1], [0], [0], [1], [0, 0, 1, 1], [], []>} : vector<8x80xbf16>, vector<80x128xbf16>, vector<8x128xf32> -> vector<8x128xf32>
    %c0_11 = arith.constant 0 : index
    %c0_12 = arith.constant 0 : index
    %13 = vector.load %arg5[%c0_11, %c0_12] : memref<8x128xf32, #tpu.memory_space<vmem>>, vector<8x128xf32>
    tpu.vector_store %arg5[%c0_11, %c0_12], %12 {strides = array<i32>} : memref<8x128xf32, #tpu.memory_space<vmem>>, vector<8x128xf32>,
    return
  }
  func.func @transform_0(%arg0: i32) -> (i32, i32) {
    %c0_i32 = arith.constant 0 : i32
    %c0_i32_0 = arith.constant 0 : i32
    return %c0_i32, %arg0 : i32, i32
  }
  func.func @transform_1(%arg0: i32) -> (i32, i32) {
    %c0_i32 = arith.constant 0 : i32
    %c0_i32_0 = arith.constant 0 : i32
    %c0_i32_1 = arith.constant 0 : i32
    return %c0_i32, %c0_i32_0 : i32, i32
  }
  func.func @transform_2(%arg0: i32) -> (i32, i32) {
    %c0_i32 = arith.constant 0 : i32
    %c0_i32_0 = arith.constant 0 : i32
    %c0_i32_1 = arith.constant 0 : i32
    return %c0_i32, %c0_i32_0 : i32, i32
  }
  func.func @transform_3(%arg0: i32) -> (i32, i32) {
    %c0_i32 = arith.constant 0 : i32
    %c0_i32_0 = arith.constant 0 : i32
    %c0_i32_1 = arith.constant 0 : i32
    return %c0_i32, %c0_i32_0 : i32, i32
  }
  func.func @transform_4(%arg0: i32) -> (i32, i32) {
    %c0_i32 = arith.constant 0 : i32
    %c0_i32_0 = arith.constant 0 : i32
    return %c0_i32, %arg0 : i32, i32
  }
}

</mosaic_0001>

<llo_original>
// kernel: tpu_custom_call.1
$region0: #{tpu_custom_call.1}
  #allocation0 [shape = 'u32[]', space=smem, size = 0x4, offset = 0x4, fixed_abs, tag = 'smem constant byte address 0x4 - core index']
  #allocation1 [shape = 'u32[144,128]{1,0:T(1,128)}', space=vmem, size = 0x12000, scoped, tag = 'internal scratch']
  %s0 = inlined_call_operand.vmem [shape: bf16[8,128], index: 0, kind: input, shape index: {}]
  %s1 = inlined_call_operand.vmem [shape: bf16[48,8], index: 1, kind: input, shape index: {}]
  %s2 = inlined_call_operand.vmem [shape: bf16[80,48], index: 2, kind: input, shape index: {}]
  %s3 = inlined_call_operand.vmem [shape: bf16[8,80], index: 3, kind: input, shape index: {}]
  %s4 = inlined_call_operand.hbm [shape: f32[8,128], index: 4, kind: output, shape index: {}]
  %s5 = sld [smem:[#allocation0]]
  $region26: #{tpu_custom_call.1} parent=0
    _
  %s7 = ssub.s32 1, %s5
  %s8 = scalar_select 0, %s7, %s5
  $region1: #{tpu_custom_call.1} parent=0
    #allocation2 [shape = 'u8[4096]{0}', space=vmem, size = 0x1000, scoped, tag = 'output window, operand 0, single buffered']
    #allocation3 [shape = 's32[1]{0}', space=sflag, size = 0x4, scoped, tag = 'scoped memory for tpu_custom_call.1']
    %9 = vsyncpa [#allocation3], 0
    // Predicated region
    $region2: #{tpu_custom_call.1} parent=1 // pred_check
      _
    $region3: #{tpu_custom_call.1} parent=1 // pred_check_branch
      %11 = sbr.rel (0) target = $region5
    $region4: #{tpu_custom_call.1} parent=1 // pred_region
      _
    $region5: #{tpu_custom_call.1} parent=1 // pred_fallthru
      _
    // Predicated region
    $region6: #{tpu_custom_call.1} parent=1 // pred_check
      _
    $region7: #{tpu_custom_call.1} parent=1 // pred_check_branch
      %13 = sbr.rel (0) target = $region9
    $region8: #{tpu_custom_call.1} parent=1 // pred_region
      _
    $region9: #{tpu_custom_call.1} parent=1 // pred_fallthru
      _
    // Predicated region
    $region10: #{tpu_custom_call.1} parent=1 // pred_check
      _
    $region11: #{tpu_custom_call.1} parent=1 // pred_check_branch
      %15 = sbr.rel (0) target = $region13
    $region12: #{tpu_custom_call.1} parent=1 // pred_region
      _
    $region13: #{tpu_custom_call.1} parent=1 // pred_fallthru
      _
    // Predicated region
    $region14: #{tpu_custom_call.1} parent=1 // pred_check
      _
    $region15: #{tpu_custom_call.1} parent=1 // pred_check_branch
      %17 = sbr.rel (0) target = $region17
    $region16: #{tpu_custom_call.1} parent=1 // pred_region
      _
    $region17: #{tpu_custom_call.1} parent=1 // pred_fallthru
      _
    %v19 = vld [vmem:[%s0] sm:$0xf]
    %v20 = vld [vmem:[%s1] sm:$0xf]
    %v21 = vld [vmem:[%s1 + $0x4] sm:$0xf]
    %v22 = vld [vmem:[%s1 + $0x8] sm:$0xf]
    %v23 = vld [vmem:[%s1 + $0xc] sm:$0xf]
    %v24 = vld [vmem:[%s1 + $0x10] sm:$0xf]
    %v25 = vld [vmem:[%s1 + $0x14] sm:$0xf]
    %v32 = vunpack.c.l.b16 %v20
    %v33 = vunpack.c.l.b16 %v21
    %v34 = vunpack.c.l.b16 %v22
    %v35 = vunpack.c.l.b16 %v23
    %v36 = vunpack.c.l.b16 %v24
    %v37 = vunpack.c.l.b16 %v25
    %v38 = vpack.c.b16 %v33, %v32
    %v39 = vpack.c.b16 %v35, %v34
    %v40 = vpack.c.b16 %v37, %v36
    %vm41 = vcmask 64512
    %v43 = vsel %vm41, %v38, 0
    %v46 = vsel %vm41, %v39, 0
    %v49 = vsel %vm41, %v40, 0
    %vm51 = vcmask 1043456
    %v53 = vsel %vm51, %v19, 0
    %55 = vmatprep.subr.bf16.mxu0 0
    %56 = vmatpush1.bf16.msra.mxu0 %v53
    %57 = vmatprep.subr.bf16.mxu0 0
    %58 = vmatpush1.bf16.msra.mxu0 0
    %59 = vmatprep.subr.bf16.mxu0 0
    %60 = vmatpush1.bf16.msra.mxu0 0
    %61 = vmatprep.subr.bf16.mxu0 0
    %62 = vmatpush1.bf16.msra.mxu0 0
    %63 = vmatprep.subr.bf16.mxu0 0
    %64 = vmatpush1.bf16.msra.mxu0 0
    %65 = vmatprep.subr.bf16.mxu0 0
    %66 = vmatpush1.bf16.msra.mxu0 0
    %67 = vmatprep.subr.bf16.mxu0 0
    %68 = vmatpush1.bf16.msra.mxu0 0
    %69 = vmatprep.subr.bf16.mxu0 0
    %70 = vmatpush1.bf16.msra.mxu0 0
    %71 = vmatprep.subr.bf16.mxu0 0
    %72 = vmatpush1.bf16.msra.mxu0 0
    %73 = vmatprep.subr.bf16.mxu0 0
    %74 = vmatpush1.bf16.msra.mxu0 0
    %75 = vmatprep.subr.bf16.mxu0 0
    %76 = vmatpush1.bf16.msra.mxu0 0
    %77 = vmatprep.subr.bf16.mxu0 0
    %78 = vmatpush1.bf16.msra.mxu0 0
    %79 = vmatprep.subr.bf16.mxu0 0
    %80 = vmatpush1.bf16.msra.mxu0 0
    %81 = vmatprep.subr.bf16.mxu0 0
    %82 = vmatpush1.bf16.msra.mxu0 0
    %83 = vmatprep.subr.bf16.mxu0 0
    %84 = vmatpush1.bf16.msra.mxu0 0
    %85 = vmatprep.subr.bf16.mxu0 0
    %86 = vmatpush1.bf16.msra.mxu0 0
    %87 = vmatprep.mubr.bf16.mxu0 0
    %88 = vmatmul.mubr.bf16.gmra.mrb[0].mxu0 %v43
    %v89 = vpop.f32.mrb[0].mxu0
    %v90 = vadd.f32 0.0, %v89
    %v91 = vpop.f32.mrb[0].mxu0
    %v92 = vpop.f32.mrb[0].mxu0
    %v93 = vadd.f32 0.0, %v92
    %v94 = vpop.f32.mrb[0].mxu0
    %95 = vmatprep.mubr.bf16.mxu0 0
    %96 = vmatmul.mubr.bf16.gmra.mrb[0].mxu0 %v46
    %v97 = vpop.f32.mrb[0].mxu0
    %v98 = vadd.f32 0.0, %v97
    %v99 = vpop.f32.mrb[0].mxu0
    %v100 = vpop.f32.mrb[0].mxu0
    %v101 = vadd.f32 0.0, %v100
    %v102 = vpop.f32.mrb[0].mxu0
    %103 = vmatprep.mubr.bf16.mxu0 0
    %104 = vmatmul.mubr.bf16.gmra.mrb[0].mxu0 %v49
    %v105 = vpop.f32.mrb[0].mxu0
    %v106 = vadd.f32 0.0, %v105
    %v107 = vpop.f32.mrb[0].mxu0
    %v108 = vpop.f32.mrb[0].mxu0
    %v109 = vadd.f32 0.0, %v108
    %v110 = vpop.f32.mrb[0].mxu0
    %111 = vdwg.mxu0
    %v112 = vmax.f32 %v90, 0.0
    %v113 = vmax.f32 %v93, 0.0
    %v114 = vmax.f32 %v98, 0.0
    %v115 = vmax.f32 %v101, 0.0
    %v116 = vmax.f32 %v106, 0.0
    %v117 = vmax.f32 %v109, 0.0
    %v118 = vld [vmem:[%s2] sm:$0xf]
    %v119 = vld [vmem:[%s2 + $0x4] sm:$0xf]
    %v120 = vld [vmem:[%s2 + $0x8] sm:$0xf]
    %v121 = vld [vmem:[%s2 + $0xc] sm:$0xf]
    %v122 = vld [vmem:[%s2 + $0x10] sm:$0xf]
    %v123 = vld [vmem:[%s2 + $0x14] sm:$0xf]
    %v124 = vld [vmem:[%s2 + $0x18] sm:$0xf]
    %v125 = vld [vmem:[%s2 + $0x1c] sm:$0xf]
    %v126 = vld [vmem:[%s2 + $0x20] sm:$0xf]
    %v127 = vld [vmem:[%s2 + $0x24] sm:$0xf]
    %v128 = vpack.c.bf16 %v113, %v112
    %v129 = vpack.c.bf16 %v115, %v114
    %v130 = vpack.c.bf16 %v117, %v116
    %v141 = vunpack.c.l.b16 %v118
    %v142 = vunpack.c.l.b16 %v119
    %v143 = vunpack.c.l.b16 %v120
    %v144 = vunpack.c.l.b16 %v121
    %v145 = vunpack.c.l.b16 %v122
    %v146 = vunpack.c.l.b16 %v123
    %v147 = vunpack.c.l.b16 %v124
    %v148 = vunpack.c.l.b16 %v125
    %v149 = vunpack.c.l.b16 %v126
    %v150 = vunpack.c.l.b16 %v127
    %v151 = vpack.c.b16 %v142, %v141
    %v152 = vpack.c.b16 %v144, %v143
    %v153 = vpack.c.b16 %v146, %v145
    %v154 = vpack.c.b16 %v148, %v147
    %v155 = vpack.c.b16 %v150, %v149
    %vm156 = vcmask 392192
    %v158 = vsel %vm156, %v151, 0
    %v161 = vsel %vm156, %v152, 0
    %v164 = vsel %vm156, %v153, 0
    %v167 = vsel %vm156, %v154, 0
    %v170 = vsel %vm156, %v155, 0
    %172 = vmatprep.subr.bf16.mxu0 0
    %173 = vmatpush1.bf16.msra.mxu0 %v128
    %174 = vmatprep.subr.bf16.mxu0 0
    %175 = vmatpush1.bf16.msra.mxu0 %v129
    %176 = vmatprep.subr.bf16.mxu0 0
    %177 = vmatpush1.bf16.msra.mxu0 %v130
    %178 = vmatprep.subr.bf16.mxu0 0
    %179 = vmatpush1.bf16.msra.mxu0 0
    %180 = vmatprep.subr.bf16.mxu0 0
    %181 = vmatpush1.bf16.msra.mxu0 0
    %182 = vmatprep.subr.bf16.mxu0 0
    %183 = vmatpush1.bf16.msra.mxu0 0
    %184 = vmatprep.subr.bf16.mxu0 0
    %185 = vmatpush1.bf16.msra.mxu0 0
    %186 = vmatprep.subr.bf16.mxu0 0
    %187 = vmatpush1.bf16.msra.mxu0 0
    %188 = vmatprep.subr.bf16.mxu0 0
    %189 = vmatpush1.bf16.msra.mxu0 0
    %190 = vmatprep.subr.bf16.mxu0 0
    %191 = vmatpush1.bf16.msra.mxu0 0
    %192 = vmatprep.subr.bf16.mxu0 0
    %193 = vmatpush1.bf16.msra.mxu0 0
    %194 = vmatprep.subr.bf16.mxu0 0
    %195 = vmatpush1.bf16.msra.mxu0 0
    %196 = vmatprep.subr.bf16.mxu0 0
    %197 = vmatpush1.bf16.msra.mxu0 0
    %198 = vmatprep.subr.bf16.mxu0 0
    %199 = vmatpush1.bf16.msra.mxu0 0
    %200 = vmatprep.subr.bf16.mxu0 0
    %201 = vmatpush1.bf16.msra.mxu0 0
    %202 = vmatprep.subr.bf16.mxu0 0
    %203 = vmatpush1.bf16.msra.mxu0 0
    %204 = vmatprep.mubr.bf16.mxu0 0
    %205 = vmatmul.mubr.bf16.gmra.mrb[0].mxu0 %v158
    %v206 = vpop.f32.mrb[0].mxu0
    %v207 = vadd.f32 0.0, %v206
    %v208 = vpop.f32.mrb[0].mxu0
    %v209 = vpop.f32.mrb[0].mxu0
    %v210 = vadd.f32 0.0, %v209
    %v211 = vpop.f32.mrb[0].mxu0
    %212 = vmatprep.mubr.bf16.mxu0 0
    %213 = vmatmul.mubr.bf16.gmra.mrb[0].mxu0 %v161
    %v214 = vpop.f32.mrb[0].mxu0
    %v215 = vadd.f32 0.0, %v214
    %v216 = vpop.f32.mrb[0].mxu0
    %v217 = vpop.f32.mrb[0].mxu0
    %v218 = vadd.f32 0.0, %v217
    %v219 = vpop.f32.mrb[0].mxu0
    %220 = vmatprep.mubr.bf16.mxu0 0
    %221 = vmatmul.mubr.bf16.gmra.mrb[0].mxu0 %v164
    %v222 = vpop.f32.mrb[0].mxu0
    %v223 = vadd.f32 0.0, %v222
    %v224 = vpop.f32.mrb[0].mxu0
    %v225 = vpop.f32.mrb[0].mxu0
    %v226 = vadd.f32 0.0, %v225
    %v227 = vpop.f32.mrb[0].mxu0
    %228 = vmatprep.mubr.bf16.mxu0 0
    %229 = vmatmul.mubr.bf16.gmra.mrb[0].mxu0 %v167
    %v230 = vpop.f32.mrb[0].mxu0
    %v231 = vadd.f32 0.0, %v230
    %v232 = vpop.f32.mrb[0].mxu0
    %v233 = vpop.f32.mrb[0].mxu0
    %v234 = vadd.f32 0.0, %v233
    %v235 = vpop.f32.mrb[0].mxu0
    %236 = vmatprep.mubr.bf16.mxu0 0
    %237 = vmatmul.mubr.bf16.gmra.mrb[0].mxu0 %v170
    %v238 = vpop.f32.mrb[0].mxu0
    %v239 = vadd.f32 0.0, %v238
    %v240 = vpop.f32.mrb[0].mxu0
    %v241 = vpop.f32.mrb[0].mxu0
    %v242 = vadd.f32 0.0, %v241
    %v243 = vpop.f32.mrb[0].mxu0
    %244 = vdwg.mxu0
    %v245 = vmax.f32 %v207, 0.0
    %v246 = vmax.f32 %v210, 0.0
    %v247 = vmax.f32 %v215, 0.0
    %v248 = vmax.f32 %v218, 0.0
    %v249 = vmax.f32 %v223, 0.0
    %v250 = vmax.f32 %v226, 0.0
    %v251 = vmax.f32 %v231, 0.0
    %v252 = vmax.f32 %v234, 0.0
    %v253 = vmax.f32 %v239, 0.0
    %v254 = vmax.f32 %v242, 0.0
    %v255 = vld [vmem:[%s3] sm:$0xf]
    %v256 = vpack.c.bf16 %v246, %v245
    %v257 = vpack.c.bf16 %v248, %v247
    %v258 = vpack.c.bf16 %v250, %v249
    %v259 = vpack.c.bf16 %v252, %v251
    %v260 = vpack.c.bf16 %v254, %v253
    %vm261 = vcmask 654336
    %v263 = vsel %vm261, %v255, 0
    %265 = vmatprep.subr.bf16.mxu0 0
    %266 = vmatpush1.bf16.msra.mxu0 %v256
    %267 = vmatprep.subr.bf16.mxu0 0
    %268 = vmatpush1.bf16.msra.mxu0 %v257
    %269 = vmatprep.subr.bf16.mxu0 0
    %270 = vmatpush1.bf16.msra.mxu0 %v258
    %271 = vmatprep.subr.bf16.mxu0 0
    %272 = vmatpush1.bf16.msra.mxu0 %v259
    %273 = vmatprep.subr.bf16.mxu0 0
    %274 = vmatpush1.bf16.msra.mxu0 %v260
    %275 = vmatprep.subr.bf16.mxu0 0
    %276 = vmatpush1.bf16.msra.mxu0 0
    %277 = vmatprep.subr.bf16.mxu0 0
    %278 = vmatpush1.bf16.msra.mxu0 0
    %279 = vmatprep.subr.bf16.mxu0 0
    %280 = vmatpush1.bf16.msra.mxu0 0
    %281 = vmatprep.subr.bf16.mxu0 0
    %282 = vmatpush1.bf16.msra.mxu0 0
    %283 = vmatprep.subr.bf16.mxu0 0
    %284 = vmatpush1.bf16.msra.mxu0 0
    %285 = vmatprep.subr.bf16.mxu0 0
    %286 = vmatpush1.bf16.msra.mxu0 0
    %287 = vmatprep.subr.bf16.mxu0 0
    %288 = vmatpush1.bf16.msra.mxu0 0
    %289 = vmatprep.subr.bf16.mxu0 0
    %290 = vmatpush1.bf16.msra.mxu0 0
    %291 = vmatprep.subr.bf16.mxu0 0
    %292 = vmatpush1.bf16.msra.mxu0 0
    %293 = vmatprep.subr.bf16.mxu0 0
    %294 = vmatpush1.bf16.msra.mxu0 0
    %295 = vmatprep.subr.bf16.mxu0 0
    %296 = vmatpush1.bf16.msra.mxu0 0
    %297 = vmatprep.mubr.bf16.mxu0 0
    %298 = vmatmul.mubr.bf16.gmra.mrb[0].mxu0 %v263
    %v299 = vpop.f32.mrb[0].mxu0
    %v300 = vadd.f32 0.0, %v299
    %v301 = vpop.f32.mrb[0].mxu0
    %v302 = vpop.f32.mrb[0].mxu0
    %v303 = vpop.f32.mrb[0].mxu0
    %304 = vdwg.mxu0
    %305 = vst [vmem:[#allocation2] sm:$0xff] %v300
    // Predicated region
    $region18: #{tpu_custom_call.1} parent=1 // pred_check
      _
    $region19: #{tpu_custom_call.1} parent=1 // pred_check_branch
      %307 = sbr.rel (0) target = $region21
    $region20: #{tpu_custom_call.1} parent=1 // pred_region
      %s309 = ssub.s32 128, 128
      %310 = vsyncadd [#allocation3], %s309
      %s312 = sshll.u32 [#allocation2], 4
      %s313 = int_to_ptr.vmem [resolvable:$true] %s312
      %315 = dma.vmem_to_hbm [thread:$0]  %s313, 128, %s4, [#allocation3]
    $region21: #{tpu_custom_call.1} parent=1 // pred_fallthru
      _
    // Predicated region
    $region22: #{tpu_custom_call.1} parent=1 // pred_check
      _
    $region23: #{tpu_custom_call.1} parent=1 // pred_check_branch
      %317 = sbr.rel (0) target = $region25
    $region24: #{tpu_custom_call.1} parent=1 // pred_region
      %318 = dma.done [#allocation3], 128
    $region25: #{tpu_custom_call.1} parent=1 // pred_fallthru
      _
    %319 = vsyncpa [#allocation3], 1

</llo_original>
